<compile_context>
chip_gen: v7x
topology: tpu7x:2x2x1
jax: 0.10.0
libtpu: 0.0.40
codegen_flags: <defaults>
</compile_context>

<pallas_src>
import math

import jax
import jax.numpy as jnp
from jax.experimental import pallas as pl
from jax.experimental.pallas import tpu as pltpu


def _cdiv(a, b):
    return -(-a // b)


def _round_up(a, b):
    return _cdiv(a, b) * b


def _lcm(a, b):
    return a * b // math.gcd(a, b)


def _tpu_generation_info():
    """Returns (physical_vmem_bytes, n_tensorcores) with conservative fallbacks."""
    phys = None
    try:
        info = pltpu.get_tpu_info()
        phys = int(getattr(info, "vmem_capacity_bytes", 0))
    except Exception:
        phys = None
    if not phys or phys <= 0:
        phys = 64 << 20  # conservative (v7x-sized) fallback
    # v7x: 64 MiB VMEM / 2 TensorCores per chip; v5e/v6e: 128 MiB / 1 TC.
    n_cores = 2 if phys <= (96 << 20) else 1
    return phys, n_cores


def _vmem_budgets(phys_vmem):
    """(tile-estimate cap, used only to pick tm)."""
    if phys_vmem >= (100 << 20):      # v5e / v6e class: 128 MiB physical
        return 56 << 20
    return 26 << 20                   # v7x class: 64 MiB physical


# --------------------------------------------------------------------------- #
# Kernels
# --------------------------------------------------------------------------- #
def _up_kernel(x_ref, w_ref, b_ref, o_ref):
    # x_ref: (tm, RC), w_ref: (RC, RK), b_ref: (1, RK), o_ref: (tm, RK)
    acc = jnp.dot(x_ref[...], w_ref[...], preferred_element_type=jnp.float32)
    o_ref[...] = (acc + b_ref[...]).astype(o_ref.dtype)


def _up_kernel_regroup(x_ref, w_ref, b_ref, o_ref):
    # Natural-shape matmul, then an in-VMEM regroup of r consecutive pixel rows
    # into one lane-dense output row.  Avoids the kron r^2 weight blow-up and
    # r-fold MXU waste for shapes where the block-diagonal weight is expensive,
    # while keeping unmasked (lane-dense) output stores.
    # x_ref: (tm*r, Cin), w_ref: (Cin, KKC), b_ref: (1, KKC), o_ref: (tm, r*KKC)
    acc = jnp.dot(x_ref[...], w_ref[...], preferred_element_type=jnp.float32)
    acc = acc + b_ref[...]
    tm, rk = o_ref.shape
    o_ref[...] = acc.reshape(tm, rk).astype(o_ref.dtype)


# --------------------------------------------------------------------------- #
# Wrapper
# --------------------------------------------------------------------------- #
def up_forward(x_nchw, weight, bias, kernel_size=2, use_bf16_mxu=None):
    """ConvTranspose2d(in_dim, out_dim, kernel_size=k, stride=k) forward.

    x_nchw : (N, Cin, H, W)
    weight : (Cin, Cout, k, k)   -- PyTorch ConvTranspose2d weight layout
    bias   : (Cout,)
    returns: (N, Cout, k*H, k*W)
    """
    k = int(kernel_size)
    N, Cin, H, W = x_nchw.shape
    Cout = weight.shape[1]
    KKC = k * k * Cout
    M = N * H * W
    dt = x_nchw.dtype
    isz_out = jnp.dtype(dt).itemsize

    phys_vmem, n_cores = _tpu_generation_info()
    est_cap = _vmem_budgets(phys_vmem)

    # Optional bf16 MXU path for clearly compute-bound shapes (v6e/v7x MXUs are
    # bf16-native; v7x has no int MXU path).  Accumulation stays fp32.
    if use_bf16_mxu is None:
        intensity = (Cin * KKC) / (2.0 * (Cin + KKC))  # approx flops/byte
        use_bf16_mxu = bool(dt == jnp.float32 and intensity >= 300.0)
    cdt = jnp.bfloat16 if use_bf16_mxu else dt
    isz_in = jnp.dtype(cdt).itemsize

    # ---- flattened operands (input is the small tensor; one XLA copy) -------
    # NCHW -> NHWC -> (M, Cin)
    x_mat = jnp.transpose(x_nchw, (0, 2, 3, 1)).reshape(M, Cin).astype(cdt)
    # (Cin, Cout, ki, kj) -> (Cin, ki, kj, Cout) -> (Cin, KKC)
    w_mat = jnp.transpose(weight, (0, 2, 3, 1)).reshape(Cin, KKC).astype(cdt)
    # bias broadcast over the k*k taps (same (ki, kj, Cout) column order); fp32.
    b_row = jnp.tile(bias.astype(jnp.float32), (k * k,)).reshape(1, KKC)

    # ---- lane-dense layout ----------------------------------------------------
    # Group r consecutive pixels per output row so the last output dim is a
    # multiple of 128 (unmasked stores).  Prefer an r that also makes the LHS
    # lane dim (r*Cin) a multiple of 128, as long as the block-diagonal weight
    # stays cheap on the MXU (r*Cin <= 256, i.e. at most one extra contraction
    # tile) and small in VMEM.  Otherwise use the natural-shape regroup kernel.
    r_out = 128 // math.gcd(KKC, 128)
    if r_out == 1:
        variant, r = "kron", 1  # KKC already lane-dense: plain matmul
    else:
        r_full = _lcm(r_out, 128 // math.gcd(Cin, 128))

        def _kron_ok(rr):
            return (rr * Cin) <= 256 and (rr * Cin) * (rr * KKC) * isz_in <= (4 << 20)

        if _kron_ok(r_full):
            variant, r = "kron", r_full
        elif _kron_ok(r_out):
            variant, r = "kron", r_out
        else:
            variant, r = "regroup", r_out

    RK = r * KKC

    if variant == "kron" and r > 1:
        w_op = jnp.kron(jnp.eye(r, dtype=cdt), w_mat)  # (r*Cin, r*KKC)
        b_op = jnp.tile(b_row, (1, r))                 # (1, r*KKC) fp32
        kernel = _up_kernel
    elif variant == "kron":
        w_op, b_op = w_mat, b_row
        kernel = _up_kernel
    else:  # "regroup"
        w_op, b_op = w_mat, b_row                      # (Cin, KKC), (1, KKC)
        kernel = _up_kernel_regroup
    w_rows, w_cols = w_op.shape

    # ---- tiling / grid --------------------------------------------------------
    min_sub = max(8, 32 // isz_out)   # (8,128) f32 / (16,128) bf16 / (32,128) int8
    mg = _cdiv(M, r)                  # grouped output rows actually needed
    max_tm = 2048

    def _est_bytes(t):
        xb = 2 * t * r * Cin * isz_in          # x tile, double-buffered
        ob = 2 * t * RK * isz_out              # out tile, double-buffered
        accb = t * RK * 4                      # fp32 accumulator
        wb = 2 * w_rows * w_cols * isz_in      # resident weight (alloc'd x2)
        bb = 2 * RK * 4                        # resident bias
        return xb + ob + accb + wb + bb

    tm_cap = max_tm
    while tm_cap > min_sub and _est_bytes(tm_cap) > est_cap:
        tm_cap //= 2
    tm_cap = max(min_sub, (tm_cap // min_sub) * min_sub)

    if n_cores > 1:
        # Balanced split across TensorCores (v7x) instead of blind halving.
        nb = _round_up(_cdiv(mg, tm_cap), n_cores)
        tm = max(min_sub, min(tm_cap, _round_up(_cdiv(mg, nb), min_sub)))
    else:
        # Single TensorCore (v5e/v6e): never split just to get >1 program.
        tm = min(tm_cap, _round_up(mg, min_sub))

    nb = _cdiv(mg, tm)
    MG = nb * tm              # padded grouped-row count (exact tiling)
    M_pad = MG * r

    if M_pad > M:
        x_mat = jnp.pad(x_mat, ((0, M_pad - M), (0, 0)))

    if variant == "kron" and r > 1:
        x_op = x_mat.reshape(MG, r * Cin)
        x_block = (tm, r * Cin)
    else:
        x_op = x_mat                      # (M_pad, Cin), M_pad == MG * r
        x_block = (tm * r, Cin)

    est = _est_bytes(tm)
    vmem_limit = int(min(phys_vmem - (8 << 20), max(32 << 20, est + (8 << 20))))

    # Advisory cost hint for XLA's scheduler around the custom call.
    if variant == "kron":
        flops = 2 * MG * (r * Cin) * RK
    else:
        flops = 2 * (MG * r) * Cin * KKC
    bytes_accessed = (M_pad * Cin * isz_in + w_rows * w_cols * isz_in
                      + RK * 4 + MG * RK * isz_out)
    cost = pl.CostEstimate(flops=int(flops), transcendentals=0,
                           bytes_accessed=int(bytes_accessed))

    out_grp = pl.pallas_call(
        kernel,
        out_shape=jax.ShapeDtypeStruct((MG, RK), dt),
        grid_spec=pltpu.PrefetchScalarGridSpec(
            num_scalar_prefetch=0,
            grid=(nb,),
            in_specs=[
                pl.BlockSpec(x_block, lambda i: (i, 0)),
                # weight / bias: constant block index -> stay resident across
                # grid steps (no re-DMA between steps).
                pl.BlockSpec((w_rows, w_cols), lambda i: (0, 0)),
                pl.BlockSpec(b_op.shape, lambda i: (0, 0)),
            ],
            out_specs=pl.BlockSpec((tm, RK), lambda i: (i, 0)),
        ),
        compiler_params=pltpu.CompilerParams(
            dimension_semantics=("parallel",),
            vmem_limit_bytes=vmem_limit,
        ),
        cost_estimate=cost,
    )(x_op, w_op, b_op)

    # ---- un-group + pixel-shuffle back to NCHW (single fused XLA transpose) --
    # TODO(synk): fold this into the kernel's output BlockSpec (needs in-kernel
    # (w,kj) lane interleave); until then it is one fused transpose over HBM.
    y6 = out_grp.reshape(M_pad, KKC)[:M].reshape(N, H, W, k, k, Cout)
    # (n, h, w, ki, kj, o) -> (n, o, h, ki, w, kj) -> (N, Cout, k*H, k*W)
    y = jnp.transpose(y6, (0, 5, 1, 3, 2, 4)).reshape(N, Cout, H * k, W * k)
    return y


def _reference(x_nchw, weight, bias, kernel_size=2):
    """Plain-JAX reference of ConvTranspose2d(k, stride=k)."""
    k = kernel_size
    N, Cin, H, W = x_nchw.shape
    Cout = weight.shape[1]
    y = jnp.einsum("nchw,cokl->nohkwl", x_nchw, weight)
    y = y.reshape(N, Cout, H * k, W * k)
    return y + bias[None, :, None, None]


if __name__ == "__main__":
    # Small shapes consistent with the module: in_dim=8, out_dim=4, kernel_size=2.
    N, Cin, Cout, H, W, K = 2, 8, 4, 16, 16, 2

    key = jax.random.PRNGKey(0)
    kx, kw, kb = jax.random.split(key, 3)
    x = jax.random.normal(kx, (N, Cin, H, W), dtype=jnp.float32)
    weight = jax.random.normal(kw, (Cin, Cout, K, K), dtype=jnp.float32) * 0.1
    bias = jax.random.normal(kb, (Cout,), dtype=jnp.float32) * 0.1

    fwd = jax.jit(lambda xx, ww, bb: up_forward(xx, ww, bb, kernel_size=K))
    out = jax.block_until_ready(fwd(x, weight, bias))

    ref = _reference(x, weight, bias, kernel_size=K)
    assert out.shape == (N, Cout, H * K, W * K), out.shape
    assert jnp.allclose(out, ref, atol=1e-5, rtol=1e-5), "mismatch vs reference"

    print("KERNEL_OK")
</pallas_src>

<mosaic_0001>
module attributes {stable_mosaic.version = 11 : i64} {
  func.func @_up_kernel(%arg0: i32, %arg1: memref<16x128xf32, #tpu.memory_space<vmem>>, %arg2: memref<128x256xf32, #tpu.memory_space<vmem>>, %arg3: memref<1x256xf32, #tpu.memory_space<vmem>>, %arg4: memref<16x256xf32, #tpu.memory_space<vmem>>) attributes {dimension_semantics = [#tpu.dimension_semantics<parallel>], iteration_bounds = array<i64: 2>, scalar_prefetch = 0 : i64, scratch_operands = 0 : i64, tpu.core_type = #tpu.core_type<tc>, window_params = [{transform_indices = @transform_0, window_bounds = array<i64: 16, 128>}, {pipeline_mode = #tpu.pipeline_mode<synchronous>, transform_indices = @transform_1, window_bounds = array<i64: 128, 256>}, {pipeline_mode = #tpu.pipeline_mode<synchronous>, transform_indices = @transform_2, window_bounds = array<i64: 1, 256>}, {transform_indices = @transform_3, window_bounds = array<i64: 16, 256>}]} {
    %c0 = arith.constant 0 : index
    %c0_0 = arith.constant 0 : index
    %0 = vector.load %arg1[%c0, %c0_0] : memref<16x128xf32, #tpu.memory_space<vmem>>, vector<16x128xf32>
    %c0_1 = arith.constant 0 : index
    %c0_2 = arith.constant 0 : index
    %1 = vector.load %arg2[%c0_1, %c0_2] : memref<128x256xf32, #tpu.memory_space<vmem>>, vector<128x256xf32>
    %cst = arith.constant dense<0.000000e+00> : vector<16x256xf32>
    %2 = tpu.matmul %0, %1, %cst {dimension_numbers = #tpu.dot_dimension_numbers<[1], [0], [0], [1], [0, 0, 1, 1], [], []>} : vector<16x128xf32>, vector<128x256xf32>, vector<16x256xf32> -> vector<16x256xf32>
    %c0_3 = arith.constant 0 : index
    %c0_4 = arith.constant 0 : index
    %3 = vector.load %arg3[%c0_3, %c0_4] : memref<1x256xf32, #tpu.memory_space<vmem>>, vector<1x256xf32>
    %4 = vector.broadcast %3 : vector<1x256xf32> to vector<16x256xf32>
    %5 = arith.addf %2, %4 : vector<16x256xf32>
    %c0_5 = arith.constant 0 : index
    %c0_6 = arith.constant 0 : index
    %6 = vector.load %arg4[%c0_5, %c0_6] : memref<16x256xf32, #tpu.memory_space<vmem>>, vector<16x256xf32>
    tpu.vector_store %arg4[%c0_5, %c0_6], %5 {strides = array<i32>} : memref<16x256xf32, #tpu.memory_space<vmem>>, vector<16x256xf32>,
    return
  }
  func.func @transform_0(%arg0: i32) -> (i32, i32) {
    %c0_i32 = arith.constant 0 : i32
    %c0_i32_0 = arith.constant 0 : i32
    return %arg0, %c0_i32 : i32, i32
  }
  func.func @transform_1(%arg0: i32) -> (i32, i32) {
    %c0_i32 = arith.constant 0 : i32
    %c0_i32_0 = arith.constant 0 : i32
    %c0_i32_1 = arith.constant 0 : i32
    return %c0_i32, %c0_i32_0 : i32, i32
  }
  func.func @transform_2(%arg0: i32) -> (i32, i32) {
    %c0_i32 = arith.constant 0 : i32
    %c0_i32_0 = arith.constant 0 : i32
    %c0_i32_1 = arith.constant 0 : i32
    return %c0_i32, %c0_i32_0 : i32, i32
  }
  func.func @transform_3(%arg0: i32) -> (i32, i32) {
    %c0_i32 = arith.constant 0 : i32
    %c0_i32_0 = arith.constant 0 : i32
    return %arg0, %c0_i32 : i32, i32
  }
}

</mosaic_0001>

<llo_original>
// kernel: tile.12
$region0: #{tile.12}
  #allocation0 [shape = 's32[1]{0}', space=sflag, size = 0x4, scoped, tag = 'scoped memory for tile.12']
  %s0 = inlined_call_operand.vmem [shape: f32[4], index: 0, kind: input, shape index: {}]
  %s1 = inlined_call_operand.vmem [shape: f32[4,4], index: 1, kind: output, shape index: {}]
  // Predicated region
  $region2: #{tile.12} parent=0 // pred_check
    _
  $region3: #{tile.12} parent=0 // pred_check_branch
    %3 = sbr.rel (0) target = $region5
  $region4: #{tile.12} parent=0 // pred_region
    _
  $region5: #{tile.12} parent=0 // pred_fallthru
    _
  %v4 = vld [vmem:[%s0] ss:$0 sm:$0xff]
  %5 = vst [vmem:[%s1] sm:$0xf] %v4

// kernel: _lambda_.1
$region0: #{_lambda_.1}
  #allocation0 [shape = 'u32[]', space=smem, size = 0x4, offset = 0x4, fixed_abs, tag = 'smem constant byte address 0x4 - core index']
  #allocation1 [shape = 'u32[144,128]{1,0:T(1,128)}', space=vmem, size = 0x12000, scoped, tag = 'internal scratch']
  %s0 = inlined_call_operand.vmem [shape: f32[32,128], index: 0, kind: input, shape index: {}]
  %s1 = inlined_call_operand.vmem [shape: f32[128,256], index: 1, kind: input, shape index: {}]
  %s2 = inlined_call_operand.vmem [shape: f32[1,256], index: 2, kind: input, shape index: {}]
  %s3 = inlined_call_operand.vmem [shape: f32[32,256], index: 3, kind: output, shape index: {}]
  %s4 = sld [smem:[#allocation0]]
  $region45: #{_lambda_.1} parent=0
    _
  %s6 = ssub.s32 1, %s4
  %s7 = scalar_select 0, %s6, %s4
  loop: start=0, step=1, limit=4
  $region2: #{_lambda_.1} parent=0 // loop_pre_header
    _
  $region3: #{_lambda_.1} parent=0 // loop_header
    %s9 = sphi 0, %s13
    %p10 = scmp.ge.s32.totalorder %s9, 4
    %s19 = sphi 0, %s21
    %s22 = sphi 0, %s19
    %s23 = sphi 0, %s22
    %s39 = sphi 0, %s23
    %s43 = sphi 0, %s43
    %s45 = sphi 0, %s43
    %s46 = sphi 0, %s45
    %s60 = sphi 0, %s46
    %s64 = sphi 0, %s64
    %s66 = sphi 0, %s64
    %s67 = sphi 0, %s66
    %s81 = sphi 0, %s67
    %s87 = sphi 0, %s89
    %s90 = sphi 0, %s87
    %s91 = sphi 0, %s90
    %s107 = sphi 0, %s91
  $region4: #{_lambda_.1} parent=0 // loop_header_branch
    %12 = sbr.rel (%p10) target = $region8
  $region5: #{_lambda_.1} parent=0 // loop_body
    %s14 = ssub.s32 %s9, 1
    %s15 = ssub.s32 %s9, 2
    %s16 = sadd.s32 %s9, 1
    %s17 = ssub.s32 %s9, %s16
    %p18 = scmp.eq.s32.totalorder %s17, 0
    %s20 = sadd.s32 %s19, 1
    %s21 = scalar_select %p18, %s19, %s20
    %p24 = pneg %p18
    %p25 = scmp.eq.s32.totalorder %s9, 1
    %p26 = por %p24, %p25
    %p27 = scmp.ne.s32.totalorder %s19, %s22
    %p28 = scmp.eq.s32.totalorder %s9, 0
    %p29 = por %p27, %p28
    %p30 = scmp.ne.s32.totalorder %s19, %s22
    %p31 = scmp.eq.s32.totalorder %s14, 1
    %p32 = por %p30, %p31
    %p33 = scmp.ne.s32.totalorder %s22, %s23
    %p34 = scmp.eq.s32.totalorder %s14, 0
    %p35 = por %p33, %p34
    %p36 = scmp.ne.s32.totalorder %s22, %s23
    %p37 = scmp.eq.s32.totalorder %s15, 1
    %p38 = por %p36, %p37
    %p40 = scmp.ne.s32.totalorder %s23, %s39
    %p41 = scmp.eq.s32.totalorder %s15, 0
    %p42 = por %p40, %p41
    %s44 = sadd.s32 %s43, 1
    %p47 = scmp.eq.s32.totalorder %s9, 1
    %p48 = scmp.ne.s32.totalorder %s43, %s45
    %p49 = scmp.eq.s32.totalorder %s9, 0
    %p50 = por %p48, %p49
    %p51 = scmp.ne.s32.totalorder %s43, %s45
    %p52 = scmp.eq.s32.totalorder %s14, 1
    %p53 = por %p51, %p52
    %p54 = scmp.ne.s32.totalorder %s45, %s46
    %p55 = scmp.eq.s32.totalorder %s14, 0
    %p56 = por %p54, %p55
    %p57 = scmp.ne.s32.totalorder %s45, %s46
    %p58 = scmp.eq.s32.totalorder %s15, 1
    %p59 = por %p57, %p58
    %p61 = scmp.ne.s32.totalorder %s46, %s60
    %p62 = scmp.eq.s32.totalorder %s15, 0
    %p63 = por %p61, %p62
    %s65 = sadd.s32 %s64, 1
    %p68 = scmp.eq.s32.totalorder %s9, 1
    %p69 = scmp.ne.s32.totalorder %s64, %s66
    %p70 = scmp.eq.s32.totalorder %s9, 0
    %p71 = por %p69, %p70
    %p72 = scmp.ne.s32.totalorder %s64, %s66
    %p73 = scmp.eq.s32.totalorder %s14, 1
    %p74 = por %p72, %p73
    %p75 = scmp.ne.s32.totalorder %s66, %s67
    %p76 = scmp.eq.s32.totalorder %s14, 0
    %p77 = por %p75, %p76
    %p78 = scmp.ne.s32.totalorder %s66, %s67
    %p79 = scmp.eq.s32.totalorder %s15, 1
    %p80 = por %p78, %p79
    %p82 = scmp.ne.s32.totalorder %s67, %s81
    %p83 = scmp.eq.s32.totalorder %s15, 0
    %p84 = por %p82, %p83
    %s85 = ssub.s32 %s9, %s16
    %p86 = scmp.eq.s32.totalorder %s85, 0
    %s88 = sadd.s32 %s87, 1
    %s89 = scalar_select %p86, %s87, %s88
    %p92 = pneg %p86
    %p93 = scmp.eq.s32.totalorder %s9, 1
    %p94 = por %p92, %p93
    %p95 = scmp.ne.s32.totalorder %s87, %s90
    %p96 = scmp.eq.s32.totalorder %s9, 0
    %p97 = por %p95, %p96
    %p98 = scmp.ne.s32.totalorder %s87, %s90
    %p99 = scmp.eq.s32.totalorder %s14, 1
    %p100 = por %p98, %p99
    %p101 = scmp.ne.s32.totalorder %s90, %s91
    %p102 = scmp.eq.s32.totalorder %s14, 0
    %p103 = por %p101, %p102
    %p104 = scmp.ne.s32.totalorder %s90, %s91
    %p105 = scmp.eq.s32.totalorder %s15, 1
    %p106 = por %p104, %p105
    %p108 = scmp.ne.s32.totalorder %s91, %s107
    %p109 = scmp.eq.s32.totalorder %s15, 0
    %p110 = por %p108, %p109
    %p111 = scmp.le.s32.totalorder 1, %s9
    %p112 = scmp.lt.s32.totalorder %s9, 3
    %p113 = pnand %p111, %p112
    %p114 = pneg %p113
    // Predicated region
    $region9: #{_lambda_.1} parent=5 // pred_check
      _
    $region10: #{_lambda_.1} parent=5 // pred_check_branch
      %116 = sbr.rel (%p113) target = $region12
    $region11: #{_lambda_.1} parent=5 // pred_region
      %s117 = ssub.s32 %s9, 1
      // Predicated region
      $region13: #{_lambda_.1} parent=11 // pred_check
        %p118 = pneg %p56
      $region14: #{_lambda_.1} parent=11 // pred_check_branch
        %120 = sbr.rel (%p118) target = $region16
      $region15: #{_lambda_.1} parent=11 // pred_region
        _
      $region16: #{_lambda_.1} parent=11 // pred_fallthru
        _
      // Predicated region
      $region17: #{_lambda_.1} parent=11 // pred_check
        %p121 = pneg %p77
      $region18: #{_lambda_.1} parent=11 // pred_check_branch
        %123 = sbr.rel (%p121) target = $region20
      $region19: #{_lambda_.1} parent=11 // pred_region
        _
      $region20: #{_lambda_.1} parent=11 // pred_fallthru
        _
    $region12: #{_lambda_.1} parent=5 // pred_fallthru
      _
    %p124 = scmp.lt.s32.totalorder %s9, 2
    // Predicated region
    $region21: #{_lambda_.1} parent=5 // pred_check
      %p125 = pneg %p124
    $region22: #{_lambda_.1} parent=5 // pred_check_branch
      %127 = sbr.rel (%p125) target = $region24
    $region23: #{_lambda_.1} parent=5 // pred_region
      // Predicated region
      $region25: #{_lambda_.1} parent=23 // pred_check
        %p128 = pneg %p29
      $region26: #{_lambda_.1} parent=23 // pred_check_branch
        %130 = sbr.rel (%p128) target = $region28
      $region27: #{_lambda_.1} parent=23 // pred_region
        %s131 = smul.u32 2, %s9
        %p132 = scmp.lt.s32.totalorder %s131, 3
        %s133 = scalar_select %p132, %s131, 3
        %s134 = smul.addr %s133, 8
        %s135 = scalar_lea.vmem %s0, %s134
        %s136 = smul.u32 2, %s9
      $region28: #{_lambda_.1} parent=23 // pred_fallthru
        _
    $region24: #{_lambda_.1} parent=5 // pred_fallthru
      _
    %p137 = scmp.le.s32.totalorder 1, %s9
    %p138 = scmp.lt.s32.totalorder %s9, 3
    %p139 = pnand %p137, %p138
    %p140 = pneg %p139
    // Predicated region
    $region29: #{_lambda_.1} parent=5 // pred_check
      _
    $region30: #{_lambda_.1} parent=5 // pred_check_branch
      %142 = sbr.rel (%p139) target = $region32
    $region31: #{_lambda_.1} parent=5 // pred_region
      %s143 = ssub.s32 %s9, 1
      %s144 = smul.u32 2, %s14
      %p145 = scmp.lt.s32.totalorder %s144, 3
      %s146 = scalar_select %p145, %s144, 3
      %s147 = smul.addr %s146, 8
      %s148 = scalar_lea.vmem %s0, %s147
      %p149 = pneg %p35
      %p150 = pneg %p32
      %p151 = pneg %p56
      %p152 = pneg %p53
      %p153 = pneg %p77
      %p154 = pneg %p74
      %p155 = pneg %p103
      %p156 = pneg %p100
      %s157 = smul.u32 2, %s14
      %p158 = scmp.lt.s32.totalorder %s157, 3
      %s159 = scalar_select %p158, %s157, 3
      %s160 = smul.addr %s159, 2
      %s161 = smul.addr %s160, 8
      %s162 = scalar_lea.vmem %s3, %s161
      %s163 = smul.u32 2, %s14
      %p164 = scmp.lt.s32.totalorder %s163, 3
      %s165 = scalar_select %p164, %s163, 3
      %s166 = smul.addr %s165, 8
      %s167 = scalar_lea.vmem %s0, %s166
      %s168 = smul.u32 2, %s14
      %s169 = smul.u32 2, %s14
      %p170 = scmp.lt.s32.totalorder %s169, 3
      %s171 = scalar_select %p170, %s169, 3
      %s172 = smul.addr %s171, 2
      %s173 = smul.addr %s172, 8
      %s174 = scalar_lea.vmem %s3, %s173
      %s175 = smul.u32 2, %s14
      %v176 = vld [vmem:[%s167] sm:$0xff]
      %v177 = vld [vmem:[%s167 + $0x8] sm:$0xff]
      %v178 = vld [vmem:[%s1] sm:$0xff]
      %v179 = vld [vmem:[%s1 + $0x8] sm:$0xff]
      %v180 = vld [vmem:[%s1 + $0x10] sm:$0xff]
      %v181 = vld [vmem:[%s1 + $0x18] sm:$0xff]
      %v182 = vld [vmem:[%s1 + $0x20] sm:$0xff]
      %v183 = vld [vmem:[%s1 + $0x28] sm:$0xff]
      %v184 = vld [vmem:[%s1 + $0x30] sm:$0xff]
      %v185 = vld [vmem:[%s1 + $0x38] sm:$0xff]
      %v186 = vld [vmem:[%s1 + $0x40] sm:$0xff]
      %v187 = vld [vmem:[%s1 + $0x48] sm:$0xff]
      %v188 = vld [vmem:[%s1 + $0x50] sm:$0xff]
      %v189 = vld [vmem:[%s1 + $0x58] sm:$0xff]
      %v190 = vld [vmem:[%s1 + $0x60] sm:$0xff]
      %v191 = vld [vmem:[%s1 + $0x68] sm:$0xff]
      %v192 = vld [vmem:[%s1 + $0x70] sm:$0xff]
      %v193 = vld [vmem:[%s1 + $0x78] sm:$0xff]
      %v194 = vld [vmem:[%s1 + $0x80] sm:$0xff]
      %v195 = vld [vmem:[%s1 + $0x88] sm:$0xff]
      %v196 = vld [vmem:[%s1 + $0x90] sm:$0xff]
      %v197 = vld [vmem:[%s1 + $0x98] sm:$0xff]
      %v198 = vld [vmem:[%s1 + $0xa0] sm:$0xff]
      %v199 = vld [vmem:[%s1 + $0xa8] sm:$0xff]
      %v200 = vld [vmem:[%s1 + $0xb0] sm:$0xff]
      %v201 = vld [vmem:[%s1 + $0xb8] sm:$0xff]
      %v202 = vld [vmem:[%s1 + $0xc0] sm:$0xff]
      %v203 = vld [vmem:[%s1 + $0xc8] sm:$0xff]
      %v204 = vld [vmem:[%s1 + $0xd0] sm:$0xff]
      %v205 = vld [vmem:[%s1 + $0xd8] sm:$0xff]
      %v206 = vld [vmem:[%s1 + $0xe0] sm:$0xff]
      %v207 = vld [vmem:[%s1 + $0xe8] sm:$0xff]
      %v208 = vld [vmem:[%s1 + $0xf0] sm:$0xff]
      %v209 = vld [vmem:[%s1 + $0xf8] sm:$0xff]
      %v210 = vld [vmem:[%s2] sm:$0x3]
      %v212 = vlaneseq
      %v213 = vshrl.u32 %v212, 7
      %v214 = vsub.s32 0, %v213
      %v215 = vrot.slane %v210, %v214
      %v216 = vlaneseq
      %v217 = vshrl.u32 %v216, 7
      %v218 = vsub.s32 1, %v217
      %v219 = vrot.slane %v210, %v218
      %222 = vmatprep.subr.mxu0 %v179
      %223 = vmatpush1.msra.mxu0 %v178
      %224 = vmatprep.subr.mxu0 %v181
      %225 = vmatpush1.msra.mxu0 %v180
      %226 = vmatprep.subr.mxu0 %v183
      %227 = vmatpush1.msra.mxu0 %v182
      %228 = vmatprep.subr.mxu0 %v185
      %229 = vmatpush1.msra.mxu0 %v184
      %230 = vmatprep.subr.mxu0 %v187
      %231 = vmatpush1.msra.mxu0 %v186
      %232 = vmatprep.subr.mxu0 %v189
      %233 = vmatpush1.msra.mxu0 %v188
      %234 = vmatprep.subr.mxu0 %v191
      %235 = vmatpush1.msra.mxu0 %v190
      %236 = vmatprep.subr.mxu0 %v193
      %237 = vmatpush1.msra.mxu0 %v192
      %238 = vmatprep.subr.mxu0 %v195
      %239 = vmatpush1.msra.mxu0 %v194
      %240 = vmatprep.subr.mxu0 %v197
      %241 = vmatpush1.msra.mxu0 %v196
      %242 = vmatprep.subr.mxu0 %v199
      %243 = vmatpush1.msra.mxu0 %v198
      %244 = vmatprep.subr.mxu0 %v201
      %245 = vmatpush1.msra.mxu0 %v200
      %246 = vmatprep.subr.mxu0 %v203
      %247 = vmatpush1.msra.mxu0 %v202
      %248 = vmatprep.subr.mxu0 %v205
      %249 = vmatpush1.msra.mxu0 %v204
      %250 = vmatprep.subr.mxu0 %v207
      %251 = vmatpush1.msra.mxu0 %v206
      %252 = vmatprep.subr.mxu0 %v209
      %253 = vmatpush1.msra.mxu0 %v208
      %254 = vmatprep.subr.mxu0 0.0
      %255 = vmatpush1.msra.mxu0 0.0
      %256 = vmatprep.subr.mxu0 0.0
      %257 = vmatpush1.msra.mxu0 0.0
      %258 = vmatprep.subr.mxu0 0.0
      %259 = vmatpush1.msra.mxu0 0.0
      %260 = vmatprep.subr.mxu0 0.0
      %261 = vmatpush1.msra.mxu0 0.0
      %262 = vmatprep.subr.mxu0 0.0
      %263 = vmatpush1.msra.mxu0 0.0
      %264 = vmatprep.subr.mxu0 0.0
      %265 = vmatpush1.msra.mxu0 0.0
      %266 = vmatprep.subr.mxu0 0.0
      %267 = vmatpush1.msra.mxu0 0.0
      %268 = vmatprep.subr.mxu0 0.0
      %269 = vmatpush1.msra.mxu0 0.0
      %270 = vmatprep.subr.mxu0 0.0
      %271 = vmatpush1.msra.mxu0 0.0
      %272 = vmatprep.subr.mxu0 0.0
      %273 = vmatpush1.msra.mxu0 0.0
      %274 = vmatprep.subr.mxu0 0.0
      %275 = vmatpush1.msra.mxu0 0.0
      %276 = vmatprep.subr.mxu0 0.0
      %277 = vmatpush1.msra.mxu0 0.0
      %278 = vmatprep.subr.mxu0 0.0
      %279 = vmatpush1.msra.mxu0 0.0
      %280 = vmatprep.subr.mxu0 0.0
      %281 = vmatpush1.msra.mxu0 0.0
      %282 = vmatprep.subr.mxu0 0.0
      %283 = vmatpush1.msra.mxu0 0.0
      %284 = vmatprep.subr.mxu0 0.0
      %285 = vmatpush1.msra.mxu0 0.0
      %286 = vmatprep.mubr.f32.mxu0 0.0
      %287 = vmatmul.mubr.f32.gmra.mrb[0].mxu0 %v176
      %v288 = vpop.f32.mrb[0].mxu0
      %v289 = vadd.f32 %v215, %v288
      %v290 = vpop.f32.mrb[0].mxu0
      %v291 = vadd.f32 %v219, %v290
      %292 = vmatprep.mubr.f32.mxu0 0.0
      %293 = vmatmul.mubr.f32.gmra.mrb[0].mxu0 %v177
      %v294 = vpop.f32.mrb[0].mxu0
      %v295 = vadd.f32 %v215, %v294
      %v296 = vpop.f32.mrb[0].mxu0
      %v297 = vadd.f32 %v219, %v296
      %298 = vdwg.mxu0
      %299 = vst [vmem:[%s174] sm:$0xff] %v289
      %300 = vst [vmem:[%s174 + $0x8] sm:$0xff] %v291
      %301 = vst [vmem:[%s174 + $0x10] sm:$0xff] %v295
      %302 = vst [vmem:[%s174 + $0x18] sm:$0xff] %v297
      %s303 = smul.u32 2, %s14
      %p304 = scmp.lt.s32.totalorder %s303, 3
      %s305 = scalar_select %p304, %s303, 3
      %s306 = smul.addr %s305, 2
      %s307 = smul.addr %s306, 8
      %s308 = scalar_lea.vmem %s3, %s307
      // Predicated region
      $region33: #{_lambda_.1} parent=31 // pred_check
        %p309 = pneg %p100
      $region34: #{_lambda_.1} parent=31 // pred_check_branch
        %311 = sbr.rel (%p309) target = $region36
      $region35: #{_lambda_.1} parent=31 // pred_region
        %s312 = smul.u32 2, %s14
      $region36: #{_lambda_.1} parent=31 // pred_fallthru
        _
    $region32: #{_lambda_.1} parent=5 // pred_fallthru
      _
    %p313 = scmp.le.s32.totalorder 2, %s9
    // Predicated region
    $region37: #{_lambda_.1} parent=5 // pred_check
      %p314 = pneg %p313
    $region38: #{_lambda_.1} parent=5 // pred_check_branch
      %316 = sbr.rel (%p314) target = $region40
    $region39: #{_lambda_.1} parent=5 // pred_region
      %s317 = ssub.s32 %s9, 2
      // Predicated region
      $region41: #{_lambda_.1} parent=39 // pred_check
        %p318 = pneg %p106
      $region42: #{_lambda_.1} parent=39 // pred_check_branch
        %320 = sbr.rel (%p318) target = $region44
      $region43: #{_lambda_.1} parent=39 // pred_region
        %s321 = smul.u32 2, %s15
        %p322 = scmp.lt.s32.totalorder %s321, 3
        %s323 = scalar_select %p322, %s321, 3
        %s324 = smul.addr %s323, 2
        %s325 = smul.addr %s324, 8
        %s326 = scalar_lea.vmem %s3, %s325
      $region44: #{_lambda_.1} parent=39 // pred_fallthru
        _
    $region40: #{_lambda_.1} parent=5 // pred_fallthru
      _
  $region6: #{_lambda_.1} parent=0 // loop_footer
    %s13 = sadd.s32 1, %s9
  $region7: #{_lambda_.1} parent=0 // loop_footer_branch
    %8 = sbr.rel target = $region3
  $region8: #{_lambda_.1} parent=0 // loop_exit
    _

</llo_original>
